<compile_context>
chip_gen: v5e
topology: v5e:2x2
jax: 0.10.0
libtpu: 0.0.40
codegen_flags: <defaults>
</compile_context>

<pallas_src>
import jax
import jax.numpy as jnp
from jax.experimental import pallas as pl
from jax.experimental.pallas import tpu as pltpu


def _round_up(a, b):
    return (a + b - 1) // b * b


def _pick_tile(dim, candidates):
    """Largest candidate that exactly divides `dim` (candidates descending)."""
    for t in candidates:
        if t <= dim and dim % t == 0:
            return t
    return dim


# ---------------------------------------------------------------------------
# Kernels
# ---------------------------------------------------------------------------
def _linear_bias_kernel_single_k(x_ref, w_ref, b_ref, y_ref):
    # Whole K in one step: no accumulator scratch, bias fused into the store.
    y_ref[...] = (
        jnp.dot(x_ref[...], w_ref[...], preferred_element_type=jnp.float32)
        + b_ref[...]
    ).astype(y_ref.dtype)


def _linear_bias_kernel_multi_k(x_ref, w_ref, b_ref, y_ref, acc_ref):
    k = pl.program_id(2)

    @pl.when(k == 0)
    def _():
        # Fold the bias into the accumulator init (saves a zeros fill and an
        # extra (tm, tn) add on the last step).
        acc_ref[...] = jnp.broadcast_to(b_ref[...], acc_ref.shape).astype(
            jnp.float32
        )

    acc_ref[...] += jnp.dot(
        x_ref[...], w_ref[...], preferred_element_type=jnp.float32
    )

    @pl.when(k == pl.num_programs(2) - 1)
    def _():
        y_ref[...] = acc_ref[...].astype(y_ref.dtype)


# ---------------------------------------------------------------------------
# One-time parameter preparation (call at init, NOT per forward)
# ---------------------------------------------------------------------------
def prepare_params(weight_t, bias, compute_dtype=jnp.bfloat16):
    """Cast + pad Linear params to kernel layout once.

    Args:
      weight_t: (C_in, F) float32, torch weight transposed (F = C_out * P).
      bias:     (1, F) or (F,) float32.
    Returns:
      w_p: (K, N) compute_dtype, K = minimal padded C_in, N = round_up(F, 128)
      b_p: (1, N) float32
    """
    C_in, F = weight_t.shape
    if C_in <= 512:
        K = _round_up(C_in, 16)      # single K step; 16 = bf16 sublane pack
    else:
        K = _round_up(C_in, 128)     # K will be tiled; lane-dense tk needed
    N = _round_up(F, 128)            # lane-dense output / weight columns
    w_p = jnp.pad(weight_t.astype(compute_dtype), ((0, K - C_in), (0, N - F)))
    b_p = jnp.pad(
        jnp.asarray(bias, jnp.float32).reshape(1, F), ((0, 0), (0, N - F))
    )
    return w_p, b_p


# ---------------------------------------------------------------------------
# Forward
# ---------------------------------------------------------------------------
def upsample_linear(x, w_p, b_p, output_channels, num_points):
    """Pallas implementation of UpsampleLinear.forward.

    Args:
      x:   (B, C_in) float32
      w_p: (K, N) prepared weight (from prepare_params)
      b_p: (1, N) prepared bias   (from prepare_params)
    Returns:
      h:     (B * num_points, output_channels) float32
      batch: (B * num_points,) int32
    """
    B, C_in = x.shape
    F = output_channels * num_points
    K, N = w_p.shape
    assert K >= C_in and N >= F
    compute_dtype = w_p.dtype

    # ---- tile selection (divisors of the already-minimally-padded dims) ----
    M = _round_up(B, 16)                       # 16: bf16 sublane packing
    if M <= 512:
        tm = M                                  # single M tile => W streamed once
    else:
        tm = _pick_tile(M, (512, 256, 128, 64, 32, 16))

    if K <= 512:
        tk = K                                  # single K step (fast path)
    else:
        tk = _pick_tile(K, (512, 384, 256, 128))
    kt = K // tk

    tn = N if N <= 128 else _pick_tile(N, (512, 384, 256, 128))
    if M // tm == 1 and N // tn < 2:
        # Keep >= 2 N-tiles when possible so both v7x TensorCores get work.
        for t in (256, 128):
            if t <= N // 2 and N % t == 0:
                tn = t
                break

    grid_m, grid_n = M // tm, N // tn

    # ---- pad/cast the activation only (cheap; W/b already prepared) --------
    x_p = x.astype(compute_dtype)
    if M != B or K != C_in:
        x_p = jnp.pad(x_p, ((0, M - B), (0, K - C_in)))

    itemsize = jnp.dtype(compute_dtype).itemsize
    cost = pl.CostEstimate(
        flops=2 * M * N * K,
        transcendentals=0,
        bytes_accessed=M * K * itemsize + K * N * itemsize + N * 4 + M * N * 4,
    )
    out_shape = jax.ShapeDtypeStruct((M, N), jnp.float32)

    if kt == 1:
        y_p = pl.pallas_call(
            _linear_bias_kernel_single_k,
            out_shape=out_shape,
            grid_spec=pltpu.PrefetchScalarGridSpec(
                num_scalar_prefetch=0,
                grid=(grid_m, grid_n),
                in_specs=[
                    pl.BlockSpec((tm, K), lambda i, j: (i, 0)),   # x tile
                    pl.BlockSpec((K, tn), lambda i, j: (0, j)),   # W tile
                    pl.BlockSpec((1, tn), lambda i, j: (0, j)),   # bias tile
                ],
                out_specs=pl.BlockSpec((tm, tn), lambda i, j: (i, j)),
            ),
            compiler_params=pltpu.CompilerParams(
                dimension_semantics=("parallel", "parallel"),
            ),
            cost_estimate=cost,
        )(x_p, w_p, b_p)
    else:
        y_p = pl.pallas_call(
            _linear_bias_kernel_multi_k,
            out_shape=out_shape,
            grid_spec=pltpu.PrefetchScalarGridSpec(
                num_scalar_prefetch=0,
                grid=(grid_m, grid_n, kt),
                in_specs=[
                    pl.BlockSpec((tm, tk), lambda i, j, k: (i, k)),   # x tile
                    pl.BlockSpec((tk, tn), lambda i, j, k: (k, j)),   # W tile
                    pl.BlockSpec((1, tn), lambda i, j, k: (0, j)),    # bias
                ],
                out_specs=pl.BlockSpec((tm, tn), lambda i, j, k: (i, j)),
                scratch_shapes=[pltpu.VMEM((tm, tn), jnp.float32)],
            ),
            compiler_params=pltpu.CompilerParams(
                dimension_semantics=("parallel", "parallel", "arbitrary"),
            ),
            cost_estimate=cost,
        )(x_p, w_p, b_p)

    # Depad only if padding exists (minimal 16/128 granules keep it thin),
    # then the row-major .view(-1, output_channels).
    h = y_p if (M == B and N == F) else y_p[:B, :F]
    h = h.reshape(B * num_points, output_channels)

    # batch = arange(B).repeat_interleave(num_points): trivial XLA iota, no
    # second kernel launch.
    batch = jnp.repeat(jnp.arange(B, dtype=jnp.int32), num_points)
    return h, batch


# ---------------------------------------------------------------------------
# Reference (same compute-dtype semantics, plain JAX)
# ---------------------------------------------------------------------------
def _reference(x, weight_t, bias, output_channels, num_points, compute_dtype):
    h = (
        jnp.dot(
            x.astype(compute_dtype),
            weight_t.astype(compute_dtype),
            preferred_element_type=jnp.float32,
        )
        + jnp.asarray(bias, jnp.float32).reshape(1, -1)
    ).reshape(-1, output_channels)
    batch = jnp.repeat(jnp.arange(x.shape[0], dtype=jnp.int32), num_points)
    return h, batch


if __name__ == "__main__":
    key = jax.random.PRNGKey(0)

    def make_case(key, B, C_in, C_out, P):
        kx, kw, kb = jax.random.split(key, 3)
        F = C_out * P
        bound = 1.0 / float(C_in) ** 0.5
        x = jax.random.normal(kx, (B, C_in), jnp.float32)
        w_t = jax.random.uniform(kw, (C_in, F), jnp.float32, -bound, bound)
        b = jax.random.uniform(kb, (1, F), jnp.float32, -bound, bound)
        return x, w_t, b

    k1, k2 = jax.random.split(key)

    # Case 1: module-typical small shapes -> single-K fast path.
    B, C_in, C_out, P = 2, 32, 4, 8
    x, w_t, b = make_case(k1, B, C_in, C_out, P)
    w_p, b_p = prepare_params(w_t, b)                    # once, at init
    h, batch = upsample_linear(x, w_p, b_p, C_out, P)
    h = jax.block_until_ready(h)
    batch = jax.block_until_ready(batch)
    h_ref, batch_ref = _reference(x, w_t, b, C_out, P, jnp.bfloat16)
    assert h.shape == (B * P, C_out)
    assert batch.shape == (B * P,)
    assert jnp.allclose(h, h_ref, atol=2e-2, rtol=2e-2)
    assert jnp.array_equal(batch, batch_ref)

    # Case 2: larger C_in -> multi-K accumulator path (still modest shapes).
    B, C_in, C_out, P = 48, 768, 32, 8
    x, w_t, b = make_case(k2, B, C_in, C_out, P)
    w_p, b_p = prepare_params(w_t, b)
    h, batch = upsample_linear(x, w_p, b_p, C_out, P)
    h = jax.block_until_ready(h)
    batch = jax.block_until_ready(batch)
    h_ref, batch_ref = _reference(x, w_t, b, C_out, P, jnp.bfloat16)
    assert h.shape == (B * P, C_out)
    assert jnp.allclose(h, h_ref, atol=5e-2, rtol=5e-2)
    assert jnp.array_equal(batch, batch_ref)

    print("KERNEL_OK")
</pallas_src>

<mosaic_0001>
module attributes {stable_mosaic.version = 11 : i64} {
  func.func @_linear_bias_kernel_single_k(%arg0: i32, %arg1: i32, %arg2: memref<16x32xbf16, #tpu.memory_space<vmem>>, %arg3: memref<32x128xbf16, #tpu.memory_space<vmem>>, %arg4: memref<1x128xf32, #tpu.memory_space<vmem>>, %arg5: memref<16x128xf32, #tpu.memory_space<vmem>>) attributes {dimension_semantics = [#tpu.dimension_semantics<parallel>, #tpu.dimension_semantics<parallel>], iteration_bounds = array<i64: 1, 1>, scalar_prefetch = 0 : i64, scratch_operands = 0 : i64, tpu.core_type = #tpu.core_type<tc>, window_params = [{transform_indices = @transform_0, window_bounds = array<i64: 16, 32>}, {transform_indices = @transform_1, window_bounds = array<i64: 32, 128>}, {transform_indices = @transform_2, window_bounds = array<i64: 1, 128>}, {transform_indices = @transform_3, window_bounds = array<i64: 16, 128>}]} {
    %c0 = arith.constant 0 : index
    %c0_0 = arith.constant 0 : index
    %0 = vector.load %arg2[%c0, %c0_0] : memref<16x32xbf16, #tpu.memory_space<vmem>>, vector<16x32xbf16>
    %c0_1 = arith.constant 0 : index
    %c0_2 = arith.constant 0 : index
    %1 = vector.load %arg3[%c0_1, %c0_2] : memref<32x128xbf16, #tpu.memory_space<vmem>>, vector<32x128xbf16>
    %cst = arith.constant dense<0.000000e+00> : vector<16x128xf32>
    %2 = tpu.matmul %0, %1, %cst {dimension_numbers = #tpu.dot_dimension_numbers<[1], [0], [0], [1], [0, 0, 1, 1], [], []>} : vector<16x32xbf16>, vector<32x128xbf16>, vector<16x128xf32> -> vector<16x128xf32>
    %c0_3 = arith.constant 0 : index
    %c0_4 = arith.constant 0 : index
    %3 = vector.load %arg4[%c0_3, %c0_4] : memref<1x128xf32, #tpu.memory_space<vmem>>, vector<1x128xf32>
    %4 = vector.broadcast %3 : vector<1x128xf32> to vector<16x128xf32>
    %5 = arith.addf %2, %4 : vector<16x128xf32>
    %c0_5 = arith.constant 0 : index
    %c0_6 = arith.constant 0 : index
    %6 = vector.load %arg5[%c0_5, %c0_6] : memref<16x128xf32, #tpu.memory_space<vmem>>, vector<16x128xf32>
    tpu.vector_store %arg5[%c0_5, %c0_6], %5 {strides = array<i32>} : memref<16x128xf32, #tpu.memory_space<vmem>>, vector<16x128xf32>,
    return
  }
  func.func @transform_0(%arg0: i32, %arg1: i32) -> (i32, i32) {
    %c0_i32 = arith.constant 0 : i32
    %c0_i32_0 = arith.constant 0 : i32
    return %arg0, %c0_i32 : i32, i32
  }
  func.func @transform_1(%arg0: i32, %arg1: i32) -> (i32, i32) {
    %c0_i32 = arith.constant 0 : i32
    %c0_i32_0 = arith.constant 0 : i32
    return %c0_i32, %arg1 : i32, i32
  }
  func.func @transform_2(%arg0: i32, %arg1: i32) -> (i32, i32) {
    %c0_i32 = arith.constant 0 : i32
    %c0_i32_0 = arith.constant 0 : i32
    return %c0_i32, %arg1 : i32, i32
  }
  func.func @transform_3(%arg0: i32, %arg1: i32) -> (i32, i32) {
    %c0_i32 = arith.constant 0 : i32
    return %arg0, %arg1 : i32, i32
  }
}

</mosaic_0001>

<llo_original>
// kernel: tpu_custom_call.1
$region0: #{tpu_custom_call.1}
  #allocation0 [shape = 'u32[]', space=smem, size = 0x4, offset = 0x4, fixed_abs, tag = 'smem constant byte address 0x4 - core index']
  #allocation1 [shape = 'u32[72,128]{1,0:T(1,128)}', space=vmem, size = 0x9000, scoped, tag = 'internal scratch']
  %s0 = inlined_call_operand.hbm [shape: bf16[16,32], index: 0, kind: input, shape index: {}]
  %s1 = inlined_call_operand.hbm [shape: bf16[32,128], index: 1, kind: input, shape index: {}]
  %s2 = inlined_call_operand.vmem [shape: f32[1,128], index: 2, kind: input, shape index: {}]
  %s3 = inlined_call_operand.hbm [shape: f32[16,128], index: 3, kind: output, shape index: {}]
  %s4 = sld [smem:[#allocation0]]
  $region30: #{tpu_custom_call.1} parent=0
    _
  %s6 = ssub.s32 1, %s4
  %s7 = scalar_select 0, %s6, %s4
  $region1: #{tpu_custom_call.1} parent=0
    #allocation2 [shape = 'u8[4096]{0}', space=vmem, size = 0x1000, scoped, tag = 'input window, operand 0, single buffered']
    #allocation3 [shape = 's32[1]{0}', space=sflag, size = 0x4, scoped, tag = 'scoped memory for tpu_custom_call.1']
    #allocation4 [shape = 's32[1]{0}', space=sflag, size = 0x4, scoped, tag = 'scoped memory for tpu_custom_call.1']
    #allocation5 [shape = 'u8[8192]{0}', space=vmem, size = 0x2000, scoped, tag = 'input window, operand 1, single buffered']
    #allocation6 [shape = 's32[1]{0}', space=sflag, size = 0x4, scoped, tag = 'scoped memory for tpu_custom_call.1']
    #allocation7 [shape = 'u8[8192]{0}', space=vmem, size = 0x2000, scoped, tag = 'output window, operand 0, single buffered']
    %8 = vsyncpa [#allocation3], 0
    %9 = vsyncpa [#allocation6], 0
    %10 = vsyncpa [#allocation4], 0
    // Predicated region
    $region2: #{tpu_custom_call.1} parent=1 // pred_check
      _
    $region3: #{tpu_custom_call.1} parent=1 // pred_check_branch
      %12 = sbr.rel (0) target = $region5
    $region4: #{tpu_custom_call.1} parent=1 // pred_region
      %14 = vsyncadd [#allocation3], 0
      %s15 = sshll.u32 %s0, 4
      %s16 = int_to_ptr.hbm [resolvable:$true] %s15
      %s17 = sshll.u32 [#allocation2], 4
      %s18 = int_to_ptr.vmem [resolvable:$true] %s17
      %23 = dma.hbm_to_vmem [thread:$0]  %s16, 128, %s18, [#allocation3], 64, 64, 4
    $region5: #{tpu_custom_call.1} parent=1 // pred_fallthru
      _
    // Predicated region
    $region6: #{tpu_custom_call.1} parent=1 // pred_check
      _
    $region7: #{tpu_custom_call.1} parent=1 // pred_check_branch
      %25 = sbr.rel (0) target = $region9
    $region8: #{tpu_custom_call.1} parent=1 // pred_region
      %27 = vsyncadd [#allocation6], 0
      %s28 = sshll.u32 %s1, 4
      %s29 = int_to_ptr.hbm [resolvable:$true] %s28
      %s30 = sshll.u32 [#allocation5], 4
      %s31 = int_to_ptr.vmem [resolvable:$true] %s30
      %36 = dma.hbm_to_vmem [thread:$0]  %s29, 256, %s31, [#allocation6], 64, 64, 4
    $region9: #{tpu_custom_call.1} parent=1 // pred_fallthru
      _
    // Predicated region
    $region10: #{tpu_custom_call.1} parent=1 // pred_check
      _
    $region11: #{tpu_custom_call.1} parent=1 // pred_check_branch
      %38 = sbr.rel (0) target = $region13
    $region12: #{tpu_custom_call.1} parent=1 // pred_region
      _
    $region13: #{tpu_custom_call.1} parent=1 // pred_fallthru
      _
    // Predicated region
    $region14: #{tpu_custom_call.1} parent=1 // pred_check
      _
    $region15: #{tpu_custom_call.1} parent=1 // pred_check_branch
      %40 = sbr.rel (0) target = $region17
    $region16: #{tpu_custom_call.1} parent=1 // pred_region
      %42 = dma.done [#allocation3], 128
    $region17: #{tpu_custom_call.1} parent=1 // pred_fallthru
      _
    // Predicated region
    $region18: #{tpu_custom_call.1} parent=1 // pred_check
      _
    $region19: #{tpu_custom_call.1} parent=1 // pred_check_branch
      %44 = sbr.rel (0) target = $region21
    $region20: #{tpu_custom_call.1} parent=1 // pred_region
      %46 = dma.done [#allocation6], 256
    $region21: #{tpu_custom_call.1} parent=1 // pred_fallthru
      _
    %v48 = vld [vmem:[#allocation2] sm:$0xf]
    %v49 = vld [vmem:[#allocation2 + $0x4] sm:$0xf]
    %v50 = vld [vmem:[#allocation5] sm:$0xf]
    %v51 = vld [vmem:[#allocation5 + $0x4] sm:$0xf]
    %v52 = vld [vmem:[#allocation5 + $0x8] sm:$0xf]
    %v53 = vld [vmem:[#allocation5 + $0xc] sm:$0xf]
    %v54 = vld [vmem:[%s2] sm:$0x1]
    %v56 = vperm.slane %v54, 0
    %v60 = vunpack.c.l.b16 %v48
    %v61 = vunpack.c.l.b16 %v49
    %v62 = vpack.c.b16 %v61, %v60
    %v67 = vunpack.c.l.b16 %v50
    %v68 = vunpack.c.l.b16 %v51
    %v69 = vunpack.c.l.b16 %v52
    %v70 = vunpack.c.l.b16 %v53
    %v71 = vpack.c.b16 %v68, %v67
    %v72 = vpack.c.b16 %v70, %v69
    %vm75 = vcmask 261120
    %v77 = vsel %vm75, %v62, 0
    %79 = vmatpush.bf16.msra.mxu0 0
    %80 = vmatpush.bf16.msra.mxu0 0
    %81 = vmatpush.bf16.msra.mxu0 0
    %82 = vmatpush.bf16.msra.mxu0 0
    %83 = vmatpush.bf16.msra.mxu0 0
    %84 = vmatpush.bf16.msra.mxu0 0
    %85 = vmatpush.bf16.msra.mxu0 %v72
    %86 = vmatpush.bf16.msra.mxu0 %v71
    %87 = vmatmul.bf16.gmra.mxu0 %v77
    %v88 = vpop.f32.mrf.mxu0
    %v89 = vadd.f32 %v56, %v88
    %v90 = vpop.f32.mrf.mxu0
    %v91 = vadd.f32 %v56, %v90
    %92 = vdwg.mxu0
    %93 = vst [vmem:[#allocation7] sm:$0xff] %v89
    %94 = vst [vmem:[#allocation7 + $0x8] sm:$0xff] %v91
    // Predicated region
    $region22: #{tpu_custom_call.1} parent=1 // pred_check
      _
    $region23: #{tpu_custom_call.1} parent=1 // pred_check_branch
      %96 = sbr.rel (0) target = $region25
    $region24: #{tpu_custom_call.1} parent=1 // pred_region
      %98 = vsyncadd [#allocation4], 0
      %s99 = sshll.u32 [#allocation7], 4
      %s100 = int_to_ptr.vmem [resolvable:$true] %s99
      %s101 = sshll.u32 %s3, 4
      %s102 = int_to_ptr.hbm [resolvable:$true] %s101
      %107 = dma.vmem_to_hbm [thread:$0]  %s100, 256, %s102, [#allocation4], 128, 128, 8
    $region25: #{tpu_custom_call.1} parent=1 // pred_fallthru
      _
    // Predicated region
    $region26: #{tpu_custom_call.1} parent=1 // pred_check
      _
    $region27: #{tpu_custom_call.1} parent=1 // pred_check_branch
      %109 = sbr.rel (0) target = $region29
    $region28: #{tpu_custom_call.1} parent=1 // pred_region
      %111 = dma.done [#allocation4], 256
    $region29: #{tpu_custom_call.1} parent=1 // pred_fallthru
      _
    %112 = vsyncpa [#allocation3], 1
    %113 = vsyncpa [#allocation6], 1
    %114 = vsyncpa [#allocation4], 1

</llo_original>
